<compile_context>
chip_gen: v6e
topology: v6e:2x2x1
jax: 0.10.0
libtpu: 0.0.40
codegen_flags: <defaults>
</compile_context>

<pallas_src>
import jax
import jax.numpy as jnp
from jax import lax
from jax.experimental import pallas as pl
from jax.experimental.pallas import tpu as pltpu


def _round_up(x, m):
    return ((x + m - 1) // m) * m


def _vmem_budget_bytes():
    """Generation-aware, conservative per-TensorCore VMEM budget."""
    try:
        cap = int(pltpu.get_tpu_info().vmem_capacity_bytes)
    except Exception:
        cap = 64 * 1024 * 1024  # assume the smallest generation (v7x: 64 MiB/TC)
    # Use at most half of physical VMEM, and never more than 48 MiB
    # (leaves headroom for the compiler / other allocations on all gens).
    return min(cap // 2, 48 * 1024 * 1024)


def critic_kernel(x_ref, w1_ref, b1_ref, w2_ref, b2_ref, w3_ref, b3_ref, o_ref):
    cdt = w1_ref.dtype  # MXU compute dtype (f32 default, bf16 opt-in)

    # layer 1: Linear + ReLU   (tile_b, D) @ (D, HP) -> (tile_b, HP)
    h1 = jnp.dot(x_ref[...], w1_ref[...], preferred_element_type=jnp.float32)
    h1 = jnp.maximum(h1 + b1_ref[...], 0.0).astype(cdt)

    # layer 2: Linear + ReLU   (tile_b, HP) @ (HP, HP) -> (tile_b, HP)
    h2 = jnp.dot(h1, w2_ref[...], preferred_element_type=jnp.float32)
    h2 = jnp.maximum(h2 + b2_ref[...], 0.0).astype(cdt)

    # layer 3: (1, HP) . (tile_b, HP)^T -> (1, tile_b): lane-dense output row,
    # full-K MXU pass (avoids a 1-output-lane matmul and a strided store).
    out_row = lax.dot_general(
        w3_ref[...], h2,
        dimension_numbers=(((1,), (1,)), ((), ())),
        preferred_element_type=jnp.float32)
    o_ref[0] = (out_row + b3_ref[0]).astype(o_ref.dtype)


def prepare_params(params, *, compute_dtype=jnp.float32):
    """One-time (per parameter update) kernel-layout prep.

    Zero-pads the hidden dim to a full 128-lane width (exact: padded units have
    zero weights/biases, stay 0 through ReLU, contribute nothing).  Weights are
    stored as (in_features, out_features) == W^T of nn.Linear.
    """
    w1, b1, w2, b2, w3, b3 = params
    D, H = w1.shape
    HP = _round_up(H, 128)
    f32 = jnp.float32
    cdt = compute_dtype

    w1p = jnp.zeros((D, HP), cdt).at[:, :H].set(w1.astype(cdt))
    b1p = jnp.zeros((1, HP), f32).at[:, :H].set(jnp.reshape(b1, (1, H)).astype(f32))
    w2p = jnp.zeros((HP, HP), cdt).at[:H, :H].set(w2.astype(cdt))
    b2p = jnp.zeros((1, HP), f32).at[:, :H].set(jnp.reshape(b2, (1, H)).astype(f32))
    w3p = jnp.zeros((1, HP), cdt).at[:, :H].set(jnp.reshape(w3, (1, H)).astype(cdt))
    b3v = jnp.reshape(b3, (1,)).astype(f32)

    return {
        "w1": w1p, "b1": b1p, "w2": w2p, "b2": b2p, "w3": w3p, "b3": b3v,
        "ob_dim": D, "hidden": H, "hidden_padded": HP, "compute_dtype": cdt,
    }


def _pick_batch_tile(B, D, HP, batch_tile, vmem_budget, itemsize):
    """Largest VMEM-safe batch tile (multiple of 8), keeping >=2 grid steps."""
    D_lanes = _round_up(max(D, 1), 128)
    # Per batch-row VMEM bytes: lane-padded state block (double-buffered) +
    # f32 h1/h2 temporaries + f32 (1, tile_b) output block (double-buffered).
    per_row = 2 * D_lanes * itemsize + 2 * HP * 4 + 2 * 4
    # Grid-invariant weights/biases (double-buffered, sublane-padded biases).
    fixed = 2 * ((_round_up(D, 8) * HP + HP * HP + HP) * itemsize + 3 * 8 * HP * 4)

    avail = max(vmem_budget - fixed, 8 * per_row)
    cap = max(8, (int(avail) // per_row) // 8 * 8)

    tile_b = max(8, (int(batch_tile) // 8) * 8)
    tile_b = min(tile_b, cap, _round_up(B, 8))
    if B >= 16:
        # Keep >= 2 grid steps so ("parallel",) can shard across v7x's 2 TCs.
        tile_b = min(tile_b, _round_up(pl.cdiv(B, 2), 8))
    tile_b = max(tile_b, 8)

    vmem_used = fixed + per_row * tile_b
    return tile_b, vmem_used


def critic_forward(state, prepared, *, batch_tile=8192):
    """state: (B, ob_dim) float32.  Returns (B,) float32 critic values."""
    w1p, b1p = prepared["w1"], prepared["b1"]
    w2p, b2p = prepared["w2"], prepared["b2"]
    w3p, b3v = prepared["w3"], prepared["b3"]
    cdt = prepared["compute_dtype"]

    B, D = state.shape
    assert D == prepared["ob_dim"]
    HP = prepared["hidden_padded"]
    f32 = jnp.float32
    itemsize = jnp.dtype(cdt).itemsize

    vmem_budget = _vmem_budget_bytes()
    tile_b, vmem_used = _pick_batch_tile(B, D, HP, batch_tile, vmem_budget, itemsize)
    num_tiles = pl.cdiv(B, tile_b)
    vmem_limit = int(min(max(vmem_used + (2 << 20), 16 << 20), vmem_budget))

    cost = pl.CostEstimate(
        flops=2 * B * (D * HP + HP * HP + HP),
        transcendentals=0,
        bytes_accessed=(B * D + D * HP + HP * HP + 2 * HP + 1) * itemsize + B * 4,
    )

    out = pl.pallas_call(
        critic_kernel,
        out_shape=jax.ShapeDtypeStruct((num_tiles, 1, tile_b), f32),
        grid=(num_tiles,),
        in_specs=[
            # state: tiled over batch; full rows -> contiguous HBM reads.
            pl.BlockSpec((tile_b, D), lambda i: (i, 0)),
            # grid-invariant weights / biases (VMEM resident, no re-DMA).
            pl.BlockSpec((D, HP), lambda i: (0, 0)),
            pl.BlockSpec((1, HP), lambda i: (0, 0)),
            pl.BlockSpec((HP, HP), lambda i: (0, 0)),
            pl.BlockSpec((1, HP), lambda i: (0, 0)),
            pl.BlockSpec((1, HP), lambda i: (0, 0)),
            # scalar output bias in SMEM.
            pl.BlockSpec(memory_space=pltpu.MemorySpace.SMEM),
        ],
        # Lane-dense output: each step writes one contiguous (1, tile_b) row.
        out_specs=pl.BlockSpec((1, 1, tile_b), lambda i: (i, 0, 0)),
        compiler_params=pltpu.CompilerParams(
            dimension_semantics=("parallel",),   # shards grid across v7x TCs
            vmem_limit_bytes=vmem_limit,
        ),
        cost_estimate=cost,
    )(state.astype(cdt), w1p, b1p, w2p, b2p, w3p, b3v)

    # (num_tiles, 1, tile_b) -> (B,); drop padding rows from the ragged tail.
    return out.reshape(num_tiles * tile_b)[:B]


def init_params(key, ob_dim, layer_size):
    """PyTorch-style uniform(+-1/sqrt(fan_in)) init.
    Weights stored as (in_features, out_features) — i.e. W^T of nn.Linear."""
    ks = jax.random.split(key, 6)

    def lin(kw, kb, fan_in, fan_out):
        bound = 1.0 / jnp.sqrt(fan_in)
        w = jax.random.uniform(kw, (fan_in, fan_out), jnp.float32, -bound, bound)
        b = jax.random.uniform(kb, (1, fan_out), jnp.float32, -bound, bound)
        return w, b

    w1, b1 = lin(ks[0], ks[1], ob_dim, layer_size)
    w2, b2 = lin(ks[2], ks[3], layer_size, layer_size)
    w3, b3 = lin(ks[4], ks[5], layer_size, 1)
    return (w1, b1, w2, b2, w3, b3)


if __name__ == "__main__":
    key = jax.random.PRNGKey(0)
    k_state, k_params = jax.random.split(key)

    B, OB_DIM, LAYER_SIZE = 16, 16, 32
    state = jax.random.normal(k_state, (B, OB_DIM), dtype=jnp.float32)
    params = init_params(k_params, OB_DIM, LAYER_SIZE)

    # One-time parameter prep (done per parameter update, not per forward).
    prepped = prepare_params(params)

    # Small batch_tile so the test exercises a multi-step ("parallel") grid.
    out = critic_forward(state, prepped, batch_tile=8)
    out = jax.block_until_ready(out)

    # Pure-JAX reference check of the fused kernel.
    w1, b1, w2, b2, w3, b3 = params
    ref = jnp.maximum(state @ w1 + b1, 0.0)
    ref = jnp.maximum(ref @ w2 + b2, 0.0)
    ref = jnp.squeeze(ref @ w3 + b3, axis=-1)
    assert out.shape == (B,)
    assert jnp.allclose(out, ref, atol=1e-5, rtol=1e-5)

    print("KERNEL_OK")
</pallas_src>

<mosaic_0001>
module attributes {stable_mosaic.version = 11 : i64} {
  func.func @critic_kernel(%arg0: i32, %arg1: memref<8x16xf32, #tpu.memory_space<vmem>>, %arg2: memref<16x128xf32, #tpu.memory_space<vmem>>, %arg3: memref<1x128xf32, #tpu.memory_space<vmem>>, %arg4: memref<128x128xf32, #tpu.memory_space<vmem>>, %arg5: memref<1x128xf32, #tpu.memory_space<vmem>>, %arg6: memref<1x128xf32, #tpu.memory_space<vmem>>, %arg7: memref<1xf32, #tpu.memory_space<smem>>, %arg8: memref<1x1x8xf32, #tpu.memory_space<vmem>>) attributes {dimension_semantics = [#tpu.dimension_semantics<parallel>], iteration_bounds = array<i64: 2>, scalar_prefetch = 0 : i64, scratch_operands = 0 : i64, tpu.core_type = #tpu.core_type<tc>, window_params = [{transform_indices = @transform_0, window_bounds = array<i64: 8, 16>}, {pipeline_mode = #tpu.pipeline_mode<synchronous>, transform_indices = @transform_1, window_bounds = array<i64: 16, 128>}, {pipeline_mode = #tpu.pipeline_mode<synchronous>, transform_indices = @transform_2, window_bounds = array<i64: 1, 128>}, {pipeline_mode = #tpu.pipeline_mode<synchronous>, transform_indices = @transform_3, window_bounds = array<i64: 128, 128>}, {pipeline_mode = #tpu.pipeline_mode<synchronous>, transform_indices = @transform_4, window_bounds = array<i64: 1, 128>}, {pipeline_mode = #tpu.pipeline_mode<synchronous>, transform_indices = @transform_5, window_bounds = array<i64: 1, 128>}, {transform_indices = @transform_6, window_bounds = array<i64: 1>}, {transform_indices = @transform_7, window_bounds = array<i64: 1, 1, 8>}]} {
    %c0 = arith.constant 0 : index
    %c0_0 = arith.constant 0 : index
    %0 = vector.load %arg1[%c0, %c0_0] : memref<8x16xf32, #tpu.memory_space<vmem>>, vector<8x16xf32>
    %c0_1 = arith.constant 0 : index
    %c0_2 = arith.constant 0 : index
    %1 = vector.load %arg2[%c0_1, %c0_2] : memref<16x128xf32, #tpu.memory_space<vmem>>, vector<16x128xf32>
    %cst = arith.constant dense<0.000000e+00> : vector<8x128xf32>
    %2 = tpu.matmul %0, %1, %cst {dimension_numbers = #tpu.dot_dimension_numbers<[1], [0], [0], [1], [0, 0, 1, 1], [], []>} : vector<8x16xf32>, vector<16x128xf32>, vector<8x128xf32> -> vector<8x128xf32>
    %c0_3 = arith.constant 0 : index
    %c0_4 = arith.constant 0 : index
    %3 = vector.load %arg3[%c0_3, %c0_4] : memref<1x128xf32, #tpu.memory_space<vmem>>, vector<1x128xf32>
    %4 = vector.broadcast %3 : vector<1x128xf32> to vector<8x128xf32>
    %5 = arith.addf %2, %4 : vector<8x128xf32>
    %cst_5 = arith.constant 0.000000e+00 : f32
    %6 = vector.broadcast %cst_5 : f32 to vector<8x128xf32>
    %7 = arith.maximumf %5, %6 : vector<8x128xf32>
    %c0_6 = arith.constant 0 : index
    %c0_7 = arith.constant 0 : index
    %8 = vector.load %arg4[%c0_6, %c0_7] : memref<128x128xf32, #tpu.memory_space<vmem>>, vector<128x128xf32>
    %cst_8 = arith.constant dense<0.000000e+00> : vector<8x128xf32>
    %9 = tpu.matmul %7, %8, %cst_8 {dimension_numbers = #tpu.dot_dimension_numbers<[1], [0], [0], [1], [0, 0, 1, 1], [], []>} : vector<8x128xf32>, vector<128x128xf32>, vector<8x128xf32> -> vector<8x128xf32>
    %c0_9 = arith.constant 0 : index
    %c0_10 = arith.constant 0 : index
    %10 = vector.load %arg5[%c0_9, %c0_10] : memref<1x128xf32, #tpu.memory_space<vmem>>, vector<1x128xf32>
    %11 = vector.broadcast %10 : vector<1x128xf32> to vector<8x128xf32>
    %12 = arith.addf %9, %11 : vector<8x128xf32>
    %cst_11 = arith.constant 0.000000e+00 : f32
    %13 = vector.broadcast %cst_11 : f32 to vector<8x128xf32>
    %14 = arith.maximumf %12, %13 : vector<8x128xf32>
    %c0_12 = arith.constant 0 : index
    %c0_13 = arith.constant 0 : index
    %15 = vector.load %arg6[%c0_12, %c0_13] : memref<1x128xf32, #tpu.memory_space<vmem>>, vector<1x128xf32>
    %cst_14 = arith.constant dense<0.000000e+00> : vector<1x8xf32>
    %16 = tpu.matmul %15, %14, %cst_14 {dimension_numbers = #tpu.dot_dimension_numbers<[1], [1], [0], [0], [0, 0, 1, 0], [], []>} : vector<1x128xf32>, vector<8x128xf32>, vector<1x8xf32> -> vector<1x8xf32>
    %c0_15 = arith.constant 0 : index
    %17 = memref.load %arg7[%c0_15] : memref<1xf32, #tpu.memory_space<smem>>
    %18 = vector.broadcast %17 : f32 to vector<1x8xf32>
    %19 = arith.addf %16, %18 : vector<1x8xf32>
    %c0_16 = arith.constant 0 : index
    %c0_17 = arith.constant 0 : index
    %c0_18 = arith.constant 0 : index
    %20 = vector.load %arg8[%c0_16, %c0_17, %c0_18] : memref<1x1x8xf32, #tpu.memory_space<vmem>>, vector<1x1x8xf32>
    %21 = vector.shape_cast %20 : vector<1x1x8xf32> to vector<1x8xf32>
    %22 = vector.shape_cast %19 : vector<1x8xf32> to vector<1x1x8xf32>
    tpu.vector_store %arg8[%c0_16, %c0_17, %c0_18], %22 {strides = array<i32>} : memref<1x1x8xf32, #tpu.memory_space<vmem>>, vector<1x1x8xf32>,
    return
  }
  func.func @transform_0(%arg0: i32) -> (i32, i32) {
    %c0_i32 = arith.constant 0 : i32
    %c0_i32_0 = arith.constant 0 : i32
    return %arg0, %c0_i32 : i32, i32
  }
  func.func @transform_1(%arg0: i32) -> (i32, i32) {
    %c0_i32 = arith.constant 0 : i32
    %c0_i32_0 = arith.constant 0 : i32
    %c0_i32_1 = arith.constant 0 : i32
    return %c0_i32, %c0_i32_0 : i32, i32
  }
  func.func @transform_2(%arg0: i32) -> (i32, i32) {
    %c0_i32 = arith.constant 0 : i32
    %c0_i32_0 = arith.constant 0 : i32
    %c0_i32_1 = arith.constant 0 : i32
    return %c0_i32, %c0_i32_0 : i32, i32
  }
  func.func @transform_3(%arg0: i32) -> (i32, i32) {
    %c0_i32 = arith.constant 0 : i32
    %c0_i32_0 = arith.constant 0 : i32
    %c0_i32_1 = arith.constant 0 : i32
    return %c0_i32, %c0_i32_0 : i32, i32
  }
  func.func @transform_4(%arg0: i32) -> (i32, i32) {
    %c0_i32 = arith.constant 0 : i32
    %c0_i32_0 = arith.constant 0 : i32
    %c0_i32_1 = arith.constant 0 : i32
    return %c0_i32, %c0_i32_0 : i32, i32
  }
  func.func @transform_5(%arg0: i32) -> (i32, i32) {
    %c0_i32 = arith.constant 0 : i32
    %c0_i32_0 = arith.constant 0 : i32
    %c0_i32_1 = arith.constant 0 : i32
    return %c0_i32, %c0_i32_0 : i32, i32
  }
  func.func @transform_6(%arg0: i32) -> i32 {
    %c0_i32 = arith.constant 0 : i32
    %c0_i32_0 = arith.constant 0 : i32
    return %c0_i32 : i32
  }
  func.func @transform_7(%arg0: i32) -> (i32, i32, i32) {
    %c0_i32 = arith.constant 0 : i32
    %c0_i32_0 = arith.constant 0 : i32
    %c0_i32_1 = arith.constant 0 : i32
    return %arg0, %c0_i32, %c0_i32_0 : i32, i32, i32
  }
}

</mosaic_0001>

<llo_original>
// kernel: tpu_custom_call.1
$region0: #{tpu_custom_call.1}
  #allocation0 [shape = 'u32[]', space=smem, size = 0x4, offset = 0x4, fixed_abs, tag = 'smem constant byte address 0x4 - core index']
  #allocation1 [shape = 'u32[144,128]{1,0:T(1,128)}', space=vmem, size = 0x12000, scoped, tag = 'internal scratch']
  #allocation2 [shape = 'f32[1]{0:T(128)S(6)}', space=smem, size = 0x200, scoped, tag = 'scoped memory for tpu_custom_call.1']
  %s0 = inlined_call_operand.hbm [shape: f32[16,16], index: 0, kind: input, shape index: {}]
  %s1 = inlined_call_operand.hbm [shape: f32[16,128], index: 1, kind: input, shape index: {}]
  %s2 = inlined_call_operand.vmem [shape: f32[1,128], index: 2, kind: input, shape index: {}]
  %s3 = inlined_call_operand.hbm [shape: f32[128,128], index: 3, kind: input, shape index: {}]
  %s4 = inlined_call_operand.vmem [shape: f32[1,128], index: 4, kind: input, shape index: {}]
  %s5 = inlined_call_operand.vmem [shape: f32[1,128], index: 5, kind: input, shape index: {}]
  %s6 = inlined_call_operand.<no memory space> [shape: f32[1], index: 6, kind: input, shape index: {}]
  %s7 = inlined_call_operand.hbm [shape: f32[2,1,8], index: 7, kind: output, shape index: {}]
  %s8 = sld [smem:[#allocation0]]
  $region73: #{tpu_custom_call.1} parent=0
    _
  %s10 = ssub.s32 1, %s8
  %s11 = scalar_select 0, %s10, %s8
  %12 = sst [smem:[#allocation2]] %s6
  $region1: #{tpu_custom_call.1} parent=0
    #allocation3 [shape = 'u8[8192]{0}', space=vmem, size = 0x2000, scoped, tag = 'input window, operand 0']
    #allocation4 [shape = 's32[2]{0}', space=sflag, size = 0x8, scoped, tag = 'scoped memory for tpu_custom_call.1']
    #allocation5 [shape = 's32[2]{0}', space=sflag, size = 0x8, scoped, tag = 'scoped memory for tpu_custom_call.1']
    #allocation6 [shape = 'u8[8192]{0}', space=vmem, size = 0x2000, scoped, tag = 'input window, operand 1, single buffered']
    #allocation7 [shape = 's32[1]{0}', space=sflag, size = 0x4, scoped, tag = 'scoped memory for tpu_custom_call.1']
    #allocation8 [shape = 'u8[65536]{0}', space=vmem, size = 0x10000, scoped, tag = 'input window, operand 3, single buffered']
    #allocation9 [shape = 'u8[1024]{0}', space=vmem, size = 0x400, scoped, tag = 'output window, operand 0']
    %13 = vsyncpa [#allocation4], 0
    %s14 = scalar_lea.sflag [#allocation4], 1
    %15 = vsyncpa %s14, 0
    %16 = vsyncpa [#allocation7], 0
    %17 = vsyncpa [#allocation5], 0
    %s18 = scalar_lea.sflag [#allocation5], 1
    %19 = vsyncpa %s18, 0
    loop: start=0, step=1, limit=4
    $region2: #{tpu_custom_call.1} parent=1 // loop_pre_header
      _
    $region3: #{tpu_custom_call.1} parent=1 // loop_header
      %s21 = sphi 0, %s25
      %p22 = scmp.ge.s32.totalorder %s21, 4
      %s31 = sphi 0, %s33
      %s34 = sphi 0, %s31
      %s35 = sphi 0, %s34
      %s51 = sphi 0, %s35
      %s55 = sphi 0, %s55
      %s57 = sphi 0, %s55
      %s58 = sphi 0, %s57
      %s72 = sphi 0, %s58
      %s76 = sphi 0, %s76
      %s78 = sphi 0, %s76
      %s79 = sphi 0, %s78
      %s93 = sphi 0, %s79
      %s97 = sphi 0, %s97
      %s99 = sphi 0, %s97
      %s100 = sphi 0, %s99
      %s114 = sphi 0, %s100
      %s118 = sphi 0, %s118
      %s120 = sphi 0, %s118
      %s121 = sphi 0, %s120
      %s135 = sphi 0, %s121
      %s139 = sphi 0, %s139
      %s141 = sphi 0, %s139
      %s142 = sphi 0, %s141
      %s156 = sphi 0, %s142
      %s160 = sphi 0, %s160
      %s162 = sphi 0, %s160
      %s163 = sphi 0, %s162
      %s177 = sphi 0, %s163
      %s183 = sphi 0, %s185
      %s186 = sphi 0, %s183
      %s187 = sphi 0, %s186
      %s203 = sphi 0, %s187
    $region4: #{tpu_custom_call.1} parent=1 // loop_header_branch
      %24 = sbr.rel (%p22) target = $region8
    $region5: #{tpu_custom_call.1} parent=1 // loop_body
      %s26 = ssub.s32 %s21, 1
      %s27 = ssub.s32 %s21, 2
      %s28 = sadd.s32 %s21, 1
      %s29 = ssub.s32 %s21, %s28
      %p30 = scmp.eq.s32.totalorder %s29, 0
      %s32 = sadd.s32 %s31, 1
      %s33 = scalar_select %p30, %s31, %s32
      %p36 = pneg %p30
      %p37 = scmp.eq.s32.totalorder %s21, 1
      %p38 = por %p36, %p37
      %p39 = scmp.ne.s32.totalorder %s31, %s34
      %p40 = scmp.eq.s32.totalorder %s21, 0
      %p41 = por %p39, %p40
      %p42 = scmp.ne.s32.totalorder %s31, %s34
      %p43 = scmp.eq.s32.totalorder %s26, 1
      %p44 = por %p42, %p43
      %p45 = scmp.ne.s32.totalorder %s34, %s35
      %p46 = scmp.eq.s32.totalorder %s26, 0
      %p47 = por %p45, %p46
      %p48 = scmp.ne.s32.totalorder %s34, %s35
      %p49 = scmp.eq.s32.totalorder %s27, 1
      %p50 = por %p48, %p49
      %p52 = scmp.ne.s32.totalorder %s35, %s51
      %p53 = scmp.eq.s32.totalorder %s27, 0
      %p54 = por %p52, %p53
      %s56 = sadd.s32 %s55, 1
      %p59 = scmp.eq.s32.totalorder %s21, 1
      %p60 = scmp.ne.s32.totalorder %s55, %s57
      %p61 = scmp.eq.s32.totalorder %s21, 0
      %p62 = por %p60, %p61
      %p63 = scmp.ne.s32.totalorder %s55, %s57
      %p64 = scmp.eq.s32.totalorder %s26, 1
      %p65 = por %p63, %p64
      %p66 = scmp.ne.s32.totalorder %s57, %s58
      %p67 = scmp.eq.s32.totalorder %s26, 0
      %p68 = por %p66, %p67
      %p69 = scmp.ne.s32.totalorder %s57, %s58
      %p70 = scmp.eq.s32.totalorder %s27, 1
      %p71 = por %p69, %p70
      %p73 = scmp.ne.s32.totalorder %s58, %s72
      %p74 = scmp.eq.s32.totalorder %s27, 0
      %p75 = por %p73, %p74
      %s77 = sadd.s32 %s76, 1
      %p80 = scmp.eq.s32.totalorder %s21, 1
      %p81 = scmp.ne.s32.totalorder %s76, %s78
      %p82 = scmp.eq.s32.totalorder %s21, 0
      %p83 = por %p81, %p82
      %p84 = scmp.ne.s32.totalorder %s76, %s78
      %p85 = scmp.eq.s32.totalorder %s26, 1
      %p86 = por %p84, %p85
      %p87 = scmp.ne.s32.totalorder %s78, %s79
      %p88 = scmp.eq.s32.totalorder %s26, 0
      %p89 = por %p87, %p88
      %p90 = scmp.ne.s32.totalorder %s78, %s79
      %p91 = scmp.eq.s32.totalorder %s27, 1
      %p92 = por %p90, %p91
      %p94 = scmp.ne.s32.totalorder %s79, %s93
      %p95 = scmp.eq.s32.totalorder %s27, 0
      %p96 = por %p94, %p95
      %s98 = sadd.s32 %s97, 1
      %p101 = scmp.eq.s32.totalorder %s21, 1
      %p102 = scmp.ne.s32.totalorder %s97, %s99
      %p103 = scmp.eq.s32.totalorder %s21, 0
      %p104 = por %p102, %p103
      %p105 = scmp.ne.s32.totalorder %s97, %s99
      %p106 = scmp.eq.s32.totalorder %s26, 1
      %p107 = por %p105, %p106
      %p108 = scmp.ne.s32.totalorder %s99, %s100
      %p109 = scmp.eq.s32.totalorder %s26, 0
      %p110 = por %p108, %p109
      %p111 = scmp.ne.s32.totalorder %s99, %s100
      %p112 = scmp.eq.s32.totalorder %s27, 1
      %p113 = por %p111, %p112
      %p115 = scmp.ne.s32.totalorder %s100, %s114
      %p116 = scmp.eq.s32.totalorder %s27, 0
      %p117 = por %p115, %p116
      %s119 = sadd.s32 %s118, 1
      %p122 = scmp.eq.s32.totalorder %s21, 1
      %p123 = scmp.ne.s32.totalorder %s118, %s120
      %p124 = scmp.eq.s32.totalorder %s21, 0
      %p125 = por %p123, %p124
      %p126 = scmp.ne.s32.totalorder %s118, %s120
      %p127 = scmp.eq.s32.totalorder %s26, 1
      %p128 = por %p126, %p127
      %p129 = scmp.ne.s32.totalorder %s120, %s121
      %p130 = scmp.eq.s32.totalorder %s26, 0
      %p131 = por %p129, %p130
      %p132 = scmp.ne.s32.totalorder %s120, %s121
      %p133 = scmp.eq.s32.totalorder %s27, 1
      %p134 = por %p132, %p133
      %p136 = scmp.ne.s32.totalorder %s121, %s135
      %p137 = scmp.eq.s32.totalorder %s27, 0
      %p138 = por %p136, %p137
      %s140 = sadd.s32 %s139, 1
      %p143 = scmp.eq.s32.totalorder %s21, 1
      %p144 = scmp.ne.s32.totalorder %s139, %s141
      %p145 = scmp.eq.s32.totalorder %s21, 0
      %p146 = por %p144, %p145
      %p147 = scmp.ne.s32.totalorder %s139, %s141
      %p148 = scmp.eq.s32.totalorder %s26, 1
      %p149 = por %p147, %p148
      %p150 = scmp.ne.s32.totalorder %s141, %s142
      %p151 = scmp.eq.s32.totalorder %s26, 0
      %p152 = por %p150, %p151
      %p153 = scmp.ne.s32.totalorder %s141, %s142
      %p154 = scmp.eq.s32.totalorder %s27, 1
      %p155 = por %p153, %p154
      %p157 = scmp.ne.s32.totalorder %s142, %s156
      %p158 = scmp.eq.s32.totalorder %s27, 0
      %p159 = por %p157, %p158
      %s161 = sadd.s32 %s160, 1
      %p164 = scmp.eq.s32.totalorder %s21, 1
      %p165 = scmp.ne.s32.totalorder %s160, %s162
      %p166 = scmp.eq.s32.totalorder %s21, 0
      %p167 = por %p165, %p166
      %p168 = scmp.ne.s32.totalorder %s160, %s162
      %p169 = scmp.eq.s32.totalorder %s26, 1
      %p170 = por %p168, %p169
      %p171 = scmp.ne.s32.totalorder %s162, %s163
      %p172 = scmp.eq.s32.totalorder %s26, 0
      %p173 = por %p171, %p172
      %p174 = scmp.ne.s32.totalorder %s162, %s163
      %p175 = scmp.eq.s32.totalorder %s27, 1
      %p176 = por %p174, %p175
      %p178 = scmp.ne.s32.totalorder %s163, %s177
      %p179 = scmp.eq.s32.totalorder %s27, 0
      %p180 = por %p178, %p179
      %s181 = ssub.s32 %s21, %s28
      %p182 = scmp.eq.s32.totalorder %s181, 0
      %s184 = sadd.s32 %s183, 1
      %s185 = scalar_select %p182, %s183, %s184
      %p188 = pneg %p182
      %p189 = scmp.eq.s32.totalorder %s21, 1
      %p190 = por %p188, %p189
      %p191 = scmp.ne.s32.totalorder %s183, %s186
      %p192 = scmp.eq.s32.totalorder %s21, 0
      %p193 = por %p191, %p192
      %p194 = scmp.ne.s32.totalorder %s183, %s186
      %p195 = scmp.eq.s32.totalorder %s26, 1
      %p196 = por %p194, %p195
      %p197 = scmp.ne.s32.totalorder %s186, %s187
      %p198 = scmp.eq.s32.totalorder %s26, 0
      %p199 = por %p197, %p198
      %p200 = scmp.ne.s32.totalorder %s186, %s187
      %p201 = scmp.eq.s32.totalorder %s27, 1
      %p202 = por %p200, %p201
      %p204 = scmp.ne.s32.totalorder %s187, %s203
      %p205 = scmp.eq.s32.totalorder %s27, 0
      %p206 = por %p204, %p205
      %p207 = scmp.le.s32.totalorder 1, %s21
      %p208 = scmp.lt.s32.totalorder %s21, 3
      %p209 = pnand %p207, %p208
      %p210 = pneg %p209
      // Predicated region
      $region9: #{tpu_custom_call.1} parent=5 // pred_check
        _
      $region10: #{tpu_custom_call.1} parent=5 // pred_check_branch
        %212 = sbr.rel (%p209) target = $region12
      $region11: #{tpu_custom_call.1} parent=5 // pred_region
        %s213 = ssub.s32 %s21, 1
        // Predicated region
        $region13: #{tpu_custom_call.1} parent=11 // pred_check
          %p214 = pneg %p68
        $region14: #{tpu_custom_call.1} parent=11 // pred_check_branch
          %216 = sbr.rel (%p214) target = $region16
        $region15: #{tpu_custom_call.1} parent=11 // pred_region
          %s218 = ssub.s32 256, 256
          %219 = vsyncadd [#allocation7], %s218
          %s220 = sshll.u32 [#allocation6], 4
          %s221 = int_to_ptr.vmem [resolvable:$true] %s220
          %226 = dma.hbm_to_vmem [thread:$0]  %s1, 256, %s221, [#allocation7], 128, 128, 8
        $region16: #{tpu_custom_call.1} parent=11 // pred_fallthru
          _
        // Predicated region
        $region17: #{tpu_custom_call.1} parent=11 // pred_check
          %p227 = pneg %p89
        $region18: #{tpu_custom_call.1} parent=11 // pred_check_branch
          %229 = sbr.rel (%p227) target = $region20
        $region19: #{tpu_custom_call.1} parent=11 // pred_region
          _
        $region20: #{tpu_custom_call.1} parent=11 // pred_fallthru
          _
        // Predicated region
        $region21: #{tpu_custom_call.1} parent=11 // pred_check
          %p230 = pneg %p110
        $region22: #{tpu_custom_call.1} parent=11 // pred_check_branch
          %232 = sbr.rel (%p230) target = $region24
        $region23: #{tpu_custom_call.1} parent=11 // pred_region
          %s234 = ssub.s32 2048, 2048
          %235 = vsyncadd [#allocation7], %s234
          %s236 = sshll.u32 [#allocation8], 4
          %s237 = int_to_ptr.vmem [resolvable:$true] %s236
          %242 = dma.hbm_to_vmem [thread:$0]  %s3, 2048, %s237, [#allocation7], 128, 128, 8
        $region24: #{tpu_custom_call.1} parent=11 // pred_fallthru
          _
        // Predicated region
        $region25: #{tpu_custom_call.1} parent=11 // pred_check
          %p243 = pneg %p131
        $region26: #{tpu_custom_call.1} parent=11 // pred_check_branch
          %245 = sbr.rel (%p243) target = $region28
        $region27: #{tpu_custom_call.1} parent=11 // pred_region
          _
        $region28: #{tpu_custom_call.1} parent=11 // pred_fallthru
          _
        // Predicated region
        $region29: #{tpu_custom_call.1} parent=11 // pred_check
          %p246 = pneg %p152
        $region30: #{tpu_custom_call.1} parent=11 // pred_check_branch
          %248 = sbr.rel (%p246) target = $region32
        $region31: #{tpu_custom_call.1} parent=11 // pred_region
          _
        $region32: #{tpu_custom_call.1} parent=11 // pred_fallthru
          _
        // Predicated region
        $region33: #{tpu_custom_call.1} parent=11 // pred_check
          %p249 = pneg %p173
        $region34: #{tpu_custom_call.1} parent=11 // pred_check_branch
          %251 = sbr.rel (%p249) target = $region36
        $region35: #{tpu_custom_call.1} parent=11 // pred_region
          _
        $region36: #{tpu_custom_call.1} parent=11 // pred_fallthru
          _
      $region12: #{tpu_custom_call.1} parent=5 // pred_fallthru
        _
      %p252 = scmp.lt.s32.totalorder %s21, 2
      // Predicated region
      $region37: #{tpu_custom_call.1} parent=5 // pred_check
        %p253 = pneg %p252
      $region38: #{tpu_custom_call.1} parent=5 // pred_check_branch
        %255 = sbr.rel (%p253) target = $region40
      $region39: #{tpu_custom_call.1} parent=5 // pred_region
        // Predicated region
        $region41: #{tpu_custom_call.1} parent=39 // pred_check
          %p256 = pneg %p41
        $region42: #{tpu_custom_call.1} parent=39 // pred_check_branch
          %258 = sbr.rel (%p256) target = $region44
        $region43: #{tpu_custom_call.1} parent=39 // pred_region
          %s259 = sand.u32 %s31, 1
          %s260 = scalar_lea.sflag [#allocation4], %s259
          %s261 = sand.u32 %s31, 1
          %s262 = smul.addr %s261, 8
          %s263 = scalar_lea.vmem [#allocation3], %s262
          %s265 = ssub.s32 128, 128
          %266 = vsyncadd %s260, %s265
          %s267 = smul.addr %s21, 128
          %s268 = scalar_lea.hbm %s0, %s267
          %s270 = sshll.u32 %s263, 4
          %s271 = int_to_ptr.vmem [resolvable:$true] %s270
          %273 = dma.hbm_to_vmem [thread:$0]  %s268, 128, %s271, %s260
        $region44: #{tpu_custom_call.1} parent=39 // pred_fallthru
          _
      $region40: #{tpu_custom_call.1} parent=5 // pred_fallthru
        _
      %p274 = scmp.le.s32.totalorder 1, %s21
      %p275 = scmp.lt.s32.totalorder %s21, 3
      %p276 = pnand %p274, %p275
      %p277 = pneg %p276
      // Predicated region
      $region45: #{tpu_custom_call.1} parent=5 // pred_check
        _
      $region46: #{tpu_custom_call.1} parent=5 // pred_check_branch
        %279 = sbr.rel (%p276) target = $region48
      $region47: #{tpu_custom_call.1} parent=5 // pred_region
        %s280 = ssub.s32 %s21, 1
        %s281 = sand.u32 %s34, 1
        %s282 = scalar_lea.sflag [#allocation4], %s281
        %s283 = sand.u32 %s34, 1
        %s284 = smul.addr %s283, 8
        %s285 = scalar_lea.vmem [#allocation3], %s284
        // Predicated region
        $region49: #{tpu_custom_call.1} parent=47 // pred_check
          %p286 = pneg %p47
        $region50: #{tpu_custom_call.1} parent=47 // pred_check_branch
          %288 = sbr.rel (%p286) target = $region52
        $region51: #{tpu_custom_call.1} parent=47 // pred_region
          %289 = dma.done %s282, 128
        $region52: #{tpu_custom_call.1} parent=47 // pred_fallthru
          _
        // Predicated region
        $region53: #{tpu_custom_call.1} parent=47 // pred_check
          %p290 = pneg %p68
        $region54: #{tpu_custom_call.1} parent=47 // pred_check_branch
          %292 = sbr.rel (%p290) target = $region56
        $region55: #{tpu_custom_call.1} parent=47 // pred_region
          %293 = dma.done [#allocation7], 256
        $region56: #{tpu_custom_call.1} parent=47 // pred_fallthru
          _
        // Predicated region
        $region57: #{tpu_custom_call.1} parent=47 // pred_check
          %p294 = pneg %p110
        $region58: #{tpu_custom_call.1} parent=47 // pred_check_branch
          %296 = sbr.rel (%p294) target = $region60
        $region59: #{tpu_custom_call.1} parent=47 // pred_region
          %297 = dma.done [#allocation7], 2048
        $region60: #{tpu_custom_call.1} parent=47 // pred_fallthru
          _
        %s298 = sand.u32 %s34, 1
        %s299 = scalar_lea.sflag [#allocation4], %s298
        %s300 = sand.u32 %s34, 1
        %s301 = smul.addr %s300, 8
        %s302 = scalar_lea.vmem [#allocation3], %s301
        %p303 = pneg %p47
        %p304 = pneg %p44
        %p305 = pneg %p68
        %p306 = pneg %p65
        %p307 = pneg %p89
        %p308 = pneg %p86
        %p309 = pneg %p110
        %p310 = pneg %p107
        %p311 = pneg %p131
        %p312 = pneg %p128
        %p313 = pneg %p152
        %p314 = pneg %p149
        %p315 = pneg %p173
        %p316 = pneg %p170
        %p317 = pneg %p199
        %p318 = pneg %p196
        %s319 = sand.u32 %s186, 1
        %s320 = scalar_lea.sflag [#allocation5], %s319
        %s321 = sand.u32 %s186, 1
        %s322 = scalar_lea.vmem [#allocation9], %s321
        %v323 = vld [vmem:[%s285] sm:$0xff]
        %v324 = vld [vmem:[#allocation6] sm:$0xff]
        %v325 = vld [vmem:[#allocation6 + $0x8] sm:$0xff]
        %v326 = vld [vmem:[%s2] sm:$0x1]
        %v328 = vlaneseq
        %v329 = vshrl.u32 %v328, 7
        %v330 = vsub.s32 0, %v329
        %v331 = vrot.slane %v326, %v330
        %vm333 = vcmask 130048
        %v335 = vsel %vm333, %v323, 0
        %337 = vmatprep.subr.mxu0 0.0
        %338 = vmatpush1.msra.mxu0 0.0
        %339 = vmatprep.subr.mxu0 0.0
        %340 = vmatpush1.msra.mxu0 0.0
        %341 = vmatprep.subr.mxu0 0.0
        %342 = vmatpush1.msra.mxu0 0.0
        %343 = vmatprep.subr.mxu0 0.0
        %344 = vmatpush1.msra.mxu0 0.0
        %345 = vmatprep.subr.mxu0 0.0
        %346 = vmatpush1.msra.mxu0 0.0
        %347 = vmatprep.subr.mxu0 0.0
        %348 = vmatpush1.msra.mxu0 0.0
        %349 = vmatprep.subr.mxu0 0.0
        %350 = vmatpush1.msra.mxu0 0.0
        %351 = vmatprep.subr.mxu0 0.0
        %352 = vmatpush1.msra.mxu0 0.0
        %353 = vmatprep.subr.mxu0 0.0
        %354 = vmatpush1.msra.mxu0 0.0
        %355 = vmatprep.subr.mxu0 0.0
        %356 = vmatpush1.msra.mxu0 0.0
        %357 = vmatprep.subr.mxu0 0.0
        %358 = vmatpush1.msra.mxu0 0.0
        %359 = vmatprep.subr.mxu0 0.0
        %360 = vmatpush1.msra.mxu0 0.0
        %361 = vmatprep.subr.mxu0 0.0
        %362 = vmatpush1.msra.mxu0 0.0
        %363 = vmatprep.subr.mxu0 0.0
        %364 = vmatpush1.msra.mxu0 0.0
        %365 = vmatprep.subr.mxu0 0.0
        %366 = vmatpush1.msra.mxu0 %v325
        %367 = vmatprep.subr.mxu0 0.0
        %368 = vmatpush1.msra.mxu0 %v324
        %369 = vmatprep.subr.mxu0 0.0
        %370 = vmatpush2.msra.mxu0 0.0
        %371 = vmatprep.subr.mxu0 0.0
        %372 = vmatpush2.msra.mxu0 0.0
        %373 = vmatprep.subr.mxu0 0.0
        %374 = vmatpush2.msra.mxu0 0.0
        %375 = vmatprep.subr.mxu0 0.0
        %376 = vmatpush2.msra.mxu0 0.0
        %377 = vmatprep.subr.mxu0 0.0
        %378 = vmatpush2.msra.mxu0 0.0
        %379 = vmatprep.subr.mxu0 0.0
        %380 = vmatpush2.msra.mxu0 0.0
        %381 = vmatprep.subr.mxu0 0.0
        %382 = vmatpush2.msra.mxu0 0.0
        %383 = vmatprep.subr.mxu0 0.0
        %384 = vmatpush2.msra.mxu0 0.0
        %385 = vmatprep.subr.mxu0 0.0
        %386 = vmatpush2.msra.mxu0 0.0
        %387 = vmatprep.subr.mxu0 0.0
        %388 = vmatpush2.msra.mxu0 0.0
        %389 = vmatprep.subr.mxu0 0.0
        %390 = vmatpush2.msra.mxu0 0.0
        %391 = vmatprep.subr.mxu0 0.0
        %392 = vmatpush2.msra.mxu0 0.0
        %393 = vmatprep.subr.mxu0 0.0
        %394 = vmatpush2.msra.mxu0 0.0
        %395 = vmatprep.subr.mxu0 0.0
        %396 = vmatpush2.msra.mxu0 0.0
        %397 = vmatprep.subr.mxu0 0.0
        %398 = vmatpush2.msra.mxu0 0.0
        %399 = vmatprep.subr.mxu0 0.0
        %400 = vmatpush2.msra.mxu0 0.0
        %401 = vmatprep.mubr.f32.mxu0 0.0
        %402 = vmatmul.mubr.f32.gmra.mxu0 %v335
        %v403 = vpop.f32.mrf.mxu0
        %v404 = vadd.f32 %v331, %v403
        %v405 = vpop.f32.mrf.mxu0
        %406 = vdwg.mxu0
        %v407 = vmax.f32 %v404, 0.0
        %v408 = vld [vmem:[#allocation8] sm:$0xff]
        %v409 = vld [vmem:[#allocation8 + $0x8] sm:$0xff]
        %v410 = vld [vmem:[#allocation8 + $0x10] sm:$0xff]
        %v411 = vld [vmem:[#allocation8 + $0x18] sm:$0xff]
        %v412 = vld [vmem:[#allocation8 + $0x20] sm:$0xff]
        %v413 = vld [vmem:[#allocation8 + $0x28] sm:$0xff]
        %v414 = vld [vmem:[#allocation8 + $0x30] sm:$0xff]
        %v415 = vld [vmem:[#allocation8 + $0x38] sm:$0xff]
        %v416 = vld [vmem:[#allocation8 + $0x40] sm:$0xff]
        %v417 = vld [vmem:[#allocation8 + $0x48] sm:$0xff]
        %v418 = vld [vmem:[#allocation8 + $0x50] sm:$0xff]
        %v419 = vld [vmem:[#allocation8 + $0x58] sm:$0xff]
        %v420 = vld [vmem:[#allocation8 + $0x60] sm:$0xff]
        %v421 = vld [vmem:[#allocation8 + $0x68] sm:$0xff]
        %v422 = vld [vmem:[#allocation8 + $0x70] sm:$0xff]
        %v423 = vld [vmem:[#allocation8 + $0x78] sm:$0xff]
        %v424 = vld [vmem:[%s4] sm:$0x1]
        %v426 = vlaneseq
        %v427 = vshrl.u32 %v426, 7
        %v428 = vsub.s32 0, %v427
        %v429 = vrot.slane %v424, %v428
        %431 = vmatprep.subr.mxu0 0.0
        %432 = vmatpush1.msra.mxu0 %v423
        %433 = vmatprep.subr.mxu0 0.0
        %434 = vmatpush1.msra.mxu0 %v422
        %435 = vmatprep.subr.mxu0 0.0
        %436 = vmatpush1.msra.mxu0 %v421
        %437 = vmatprep.subr.mxu0 0.0
        %438 = vmatpush1.msra.mxu0 %v420
        %439 = vmatprep.subr.mxu0 0.0
        %440 = vmatpush1.msra.mxu0 %v419
        %441 = vmatprep.subr.mxu0 0.0
        %442 = vmatpush1.msra.mxu0 %v418
        %443 = vmatprep.subr.mxu0 0.0
        %444 = vmatpush1.msra.mxu0 %v417
        %445 = vmatprep.subr.mxu0 0.0
        %446 = vmatpush1.msra.mxu0 %v416
        %447 = vmatprep.subr.mxu0 0.0
        %448 = vmatpush1.msra.mxu0 %v415
        %449 = vmatprep.subr.mxu0 0.0
        %450 = vmatpush1.msra.mxu0 %v414
        %451 = vmatprep.subr.mxu0 0.0
        %452 = vmatpush1.msra.mxu0 %v413
        %453 = vmatprep.subr.mxu0 0.0
        %454 = vmatpush1.msra.mxu0 %v412
        %455 = vmatprep.subr.mxu0 0.0
        %456 = vmatpush1.msra.mxu0 %v411
        %457 = vmatprep.subr.mxu0 0.0
        %458 = vmatpush1.msra.mxu0 %v410
        %459 = vmatprep.subr.mxu0 0.0
        %460 = vmatpush1.msra.mxu0 %v409
        %461 = vmatprep.subr.mxu0 0.0
        %462 = vmatpush1.msra.mxu0 %v408
        %463 = vmatprep.subr.mxu0 0.0
        %464 = vmatpush2.msra.mxu0 0.0
        %465 = vmatprep.subr.mxu0 0.0
        %466 = vmatpush2.msra.mxu0 0.0
        %467 = vmatprep.subr.mxu0 0.0
        %468 = vmatpush2.msra.mxu0 0.0
        %469 = vmatprep.subr.mxu0 0.0
        %470 = vmatpush2.msra.mxu0 0.0
        %471 = vmatprep.subr.mxu0 0.0
        %472 = vmatpush2.msra.mxu0 0.0
        %473 = vmatprep.subr.mxu0 0.0
        %474 = vmatpush2.msra.mxu0 0.0
        %475 = vmatprep.subr.mxu0 0.0
        %476 = vmatpush2.msra.mxu0 0.0
        %477 = vmatprep.subr.mxu0 0.0
        %478 = vmatpush2.msra.mxu0 0.0
        %479 = vmatprep.subr.mxu0 0.0
        %480 = vmatpush2.msra.mxu0 0.0
        %481 = vmatprep.subr.mxu0 0.0
        %482 = vmatpush2.msra.mxu0 0.0
        %483 = vmatprep.subr.mxu0 0.0
        %484 = vmatpush2.msra.mxu0 0.0
        %485 = vmatprep.subr.mxu0 0.0
        %486 = vmatpush2.msra.mxu0 0.0
        %487 = vmatprep.subr.mxu0 0.0
        %488 = vmatpush2.msra.mxu0 0.0
        %489 = vmatprep.subr.mxu0 0.0
        %490 = vmatpush2.msra.mxu0 0.0
        %491 = vmatprep.subr.mxu0 0.0
        %492 = vmatpush2.msra.mxu0 0.0
        %493 = vmatprep.subr.mxu0 0.0
        %494 = vmatpush2.msra.mxu0 0.0
        %495 = vmatprep.mubr.f32.mxu0 0.0
        %496 = vmatmul.mubr.f32.gmra.mxu0 %v407
        %v497 = vpop.f32.mrf.mxu0
        %v498 = vadd.f32 %v429, %v497
        %v499 = vpop.f32.mrf.mxu0
        %500 = vdwg.mxu0
        %v501 = vmax.f32 %v498, 0.0
        %v502 = vld [vmem:[%s5] sm:$0x1]
        %s503 = sld [smem:[#allocation2]]
        %v504 = vstv %s503
        %505 = vmatprep.subr.mxu0 0.0
        %506 = vmatpush1.xpose.msra.mxu0 0.0
        %507 = vmatprep.subr.mxu0 0.0
        %508 = vmatpush1.xpose.msra.mxu0 0.0
        %509 = vmatprep.subr.mxu0 0.0
        %510 = vmatpush1.xpose.msra.mxu0 0.0
        %511 = vmatprep.subr.mxu0 0.0
        %512 = vmatpush1.xpose.msra.mxu0 0.0
        %513 = vmatprep.subr.mxu0 0.0
        %514 = vmatpush1.xpose.msra.mxu0 0.0
        %515 = vmatprep.subr.mxu0 0.0
        %516 = vmatpush1.xpose.msra.mxu0 0.0
        %517 = vmatprep.subr.mxu0 0.0
        %518 = vmatpush1.xpose.msra.mxu0 0.0
        %519 = vmatprep.subr.mxu0 0.0
        %520 = vmatpush1.xpose.msra.mxu0 0.0
        %521 = vmatprep.subr.mxu0 0.0
        %522 = vmatpush1.xpose.msra.mxu0 0.0
        %523 = vmatprep.subr.mxu0 0.0
        %524 = vmatpush1.xpose.msra.mxu0 0.0
        %525 = vmatprep.subr.mxu0 0.0
        %526 = vmatpush1.xpose.msra.mxu0 0.0
        %527 = vmatprep.subr.mxu0 0.0
        %528 = vmatpush1.xpose.msra.mxu0 0.0
        %529 = vmatprep.subr.mxu0 0.0
        %530 = vmatpush1.xpose.msra.mxu0 0.0
        %531 = vmatprep.subr.mxu0 0.0
        %532 = vmatpush1.xpose.msra.mxu0 0.0
        %533 = vmatprep.subr.mxu0 0.0
        %534 = vmatpush1.xpose.msra.mxu0 0.0
        %535 = vmatprep.subr.mxu0 0.0
        %536 = vmatpush1.xpose.msra.mxu0 %v501
        %537 = vmatprep.subr.mxu0 0.0
        %538 = vmatpush2.xpose.msra.mxu0 0.0
        %539 = vmatprep.subr.mxu0 0.0
        %540 = vmatpush2.xpose.msra.mxu0 0.0
        %541 = vmatprep.subr.mxu0 0.0
        %542 = vmatpush2.xpose.msra.mxu0 0.0
        %543 = vmatprep.subr.mxu0 0.0
        %544 = vmatpush2.xpose.msra.mxu0 0.0
        %545 = vmatprep.subr.mxu0 0.0
        %546 = vmatpush2.xpose.msra.mxu0 0.0
        %547 = vmatprep.subr.mxu0 0.0
        %548 = vmatpush2.xpose.msra.mxu0 0.0
        %549 = vmatprep.subr.mxu0 0.0
        %550 = vmatpush2.xpose.msra.mxu0 0.0
        %551 = vmatprep.subr.mxu0 0.0
        %552 = vmatpush2.xpose.msra.mxu0 0.0
        %553 = vmatprep.subr.mxu0 0.0
        %554 = vmatpush2.xpose.msra.mxu0 0.0
        %555 = vmatprep.subr.mxu0 0.0
        %556 = vmatpush2.xpose.msra.mxu0 0.0
        %557 = vmatprep.subr.mxu0 0.0
        %558 = vmatpush2.xpose.msra.mxu0 0.0
        %559 = vmatprep.subr.mxu0 0.0
        %560 = vmatpush2.xpose.msra.mxu0 0.0
        %561 = vmatprep.subr.mxu0 0.0
        %562 = vmatpush2.xpose.msra.mxu0 0.0
        %563 = vmatprep.subr.mxu0 0.0
        %564 = vmatpush2.xpose.msra.mxu0 0.0
        %565 = vmatprep.subr.mxu0 0.0
        %566 = vmatpush2.xpose.msra.mxu0 0.0
        %567 = vmatprep.subr.mxu0 0.0
        %568 = vmatpush2.xpose.msra.mxu0 0.0
        %569 = vmatprep.mubr.f32.mxu0 0.0
        %570 = vmatmul.mubr.f32.gmra.mxu0 %v502
        %v571 = vpop.f32.mrf.mxu0
        %v572 = vadd.f32 %v504, %v571
        %v573 = vpop.f32.mrf.mxu0
        %574 = vdwg.mxu0
        %vm575 = vcmask 57344
        %576 = vst.msk [vmem:[%s322] sm:$0x1] %vm575, %v572
        %s577 = sand.u32 %s186, 1
        %s578 = scalar_lea.sflag [#allocation5], %s577
        %s579 = sand.u32 %s186, 1
        %s580 = scalar_lea.vmem [#allocation9], %s579
        // Predicated region
        $region61: #{tpu_custom_call.1} parent=47 // pred_check
          %p581 = pneg %p196
        $region62: #{tpu_custom_call.1} parent=47 // pred_check_branch
          %583 = sbr.rel (%p581) target = $region64
        $region63: #{tpu_custom_call.1} parent=47 // pred_region
          %s585 = ssub.s32 16, 16
          %586 = vsyncadd %s578, %s585
          %s587 = smul.addr %s26, 16
          %s588 = scalar_lea.hbm %s7, %s587
          %s590 = sshll.u32 %s580, 4
          %s591 = int_to_ptr.vmem [resolvable:$true] %s590
          %593 = dma.vmem_to_hbm [thread:$0]  %s591, 16, %s588, %s578
        $region64: #{tpu_custom_call.1} parent=47 // pred_fallthru
          _
      $region48: #{tpu_custom_call.1} parent=5 // pred_fallthru
        _
      %p594 = scmp.le.s32.totalorder 2, %s21
      // Predicated region
      $region65: #{tpu_custom_call.1} parent=5 // pred_check
        %p595 = pneg %p594
      $region66: #{tpu_custom_call.1} parent=5 // pred_check_branch
        %597 = sbr.rel (%p595) target = $region68
      $region67: #{tpu_custom_call.1} parent=5 // pred_region
        %s598 = ssub.s32 %s21, 2
        // Predicated region
        $region69: #{tpu_custom_call.1} parent=67 // pred_check
          %p599 = pneg %p202
        $region70: #{tpu_custom_call.1} parent=67 // pred_check_branch
          %601 = sbr.rel (%p599) target = $region72
        $region71: #{tpu_custom_call.1} parent=67 // pred_region
          %s602 = sand.u32 %s187, 1
          %s603 = scalar_lea.sflag [#allocation5], %s602
          %s604 = sand.u32 %s187, 1
          %s605 = scalar_lea.vmem [#allocation9], %s604
          %606 = dma.done %s603, 16
        $region72: #{tpu_custom_call.1} parent=67 // pred_fallthru
          _
      $region68: #{tpu_custom_call.1} parent=5 // pred_fallthru
        _
    $region6: #{tpu_custom_call.1} parent=1 // loop_footer
      %s25 = sadd.s32 1, %s21
    $region7: #{tpu_custom_call.1} parent=1 // loop_footer_branch
      %20 = sbr.rel target = $region3
    $region8: #{tpu_custom_call.1} parent=1 // loop_exit
      _
    %607 = vsyncpa [#allocation4], 1
    %s608 = scalar_lea.sflag [#allocation4], 1
    %609 = vsyncpa %s608, 1
    %610 = vsyncpa [#allocation7], 1
    %611 = vsyncpa [#allocation5], 1
    %s612 = scalar_lea.sflag [#allocation5], 1
    %613 = vsyncpa %s612, 1

</llo_original>
